<compile_context>
chip_gen: v7x
topology: tpu7x:2x2x1
jax: 0.10.0
libtpu: 0.0.40
codegen_flags: <defaults>
</compile_context>

<pallas_src>
import math

import jax
import jax.numpy as jnp
from jax.experimental import pallas as pl
from jax.experimental.pallas import tpu as pltpu


def _scale_rows_kernel(x_ref, m_ref, o_ref):
    # x_ref: (TM, W)  streamed row tile
    # m_ref: (1, W)   channel mask / scale row (resident, constant index_map)
    # o_ref: (TM, W)
    o_ref[...] = x_ref[...] * m_ref[...]


def _sublane_multiple(dtype) -> int:
    # f32 -> 8, bf16 -> 16, int8/fp8 -> 32 (sub-32-bit dtypes pack along sublanes)
    return max(8, 32 // jnp.dtype(dtype).itemsize)


def _vmem_capacity_bytes() -> int:
    """Physical VMEM of the current part; conservative 64 MiB (v7x per-TC) fallback."""
    try:
        info = pltpu.get_tpu_info()
        cap = getattr(info, "vmem_capacity_bytes", None)
        if cap:
            return int(cap)
    except Exception:
        pass
    return 64 << 20


def channel_selection(
    x: jax.Array,
    indexes: jax.Array,
    *,
    target_block_bytes: int | None = None,
    alias_output: bool = True,
) -> jax.Array:
    """x: (..., D); indexes: (D,). Returns x * indexes (broadcast over the last dim)."""
    orig_shape = x.shape
    D = orig_shape[-1]
    total = math.prod(orig_shape)
    if total == 0:
        return x

    # Match PyTorch type promotion (x.mul(fp32 param) computes in the promoted dtype).
    out_dtype = jnp.result_type(x.dtype, indexes.dtype)
    if x.dtype != out_dtype:
        x = x.astype(out_dtype)
    dtype = out_dtype
    itemsize = jnp.dtype(dtype).itemsize
    mask1d = indexes.astype(dtype)

    # --- choose a lane-dense row width W (multiple of 128 if cheaply possible) ---
    lane_w = D // math.gcd(D, 128) * 128  # lcm(D, 128)
    rows_d = total // D                   # number of length-D channel rows
    if D % 128 == 0:
        W, reps = D, 1
    elif lane_w * itemsize <= (1 << 20) and rows_d >= lane_w // D:
        # Repack `reps` consecutive channel rows into one lane-dense row of width W.
        W, reps = lane_w, lane_w // D
    else:
        # Huge lcm (large odd-ish D): keep D as the (full-extent) lane axis.
        W, reps = D, 1

    sub = _sublane_multiple(dtype)
    vmem_cap = _vmem_capacity_bytes()

    # Guard against an infeasible minimal tile (very large W).
    # TODO(synk): add a second (column) grid axis for very wide channel dims.
    if 4 * sub * W * itemsize > max(vmem_cap - (16 << 20), 16 << 20):
        return (x * mask1d).reshape(orig_shape)

    head_rows_d = (rows_d // reps) * reps          # channel rows that pack evenly
    tail_rows_d = rows_d - head_rows_d             # tiny remainder (< reps rows)

    x_rows = x.reshape(rows_d, D)
    head2d = x_rows[:head_rows_d].reshape(head_rows_d // reps, W)
    mask_row = (jnp.tile(mask1d, reps) if reps > 1 else mask1d).reshape(1, W)

    rows = head_rows_d // reps

    # --- row tile size: generation-aware target, multiple of the sublane pack ---
    if target_block_bytes is None:
        # ~8 MiB tiles on 64 MiB-VMEM parts (v7x), up to 16 MiB on 128 MiB parts.
        target_block_bytes = min(16 << 20, max(2 << 20, vmem_cap // 8))
    tm = max(sub, (target_block_bytes // (W * itemsize)) // sub * sub)
    # Keep >= 4 grid steps where possible so the parallel row axis can split across
    # both TensorCores on v7x (harmless on single-TC v5e/v6e).
    if rows >= 4 * sub:
        cap = max(sub, (rows // 4) // sub * sub)
        tm = min(tm, cap)
    if tm >= rows:
        tm = rows  # full-dim block: exempt from the (8,128) divisibility rule
    grid_rows = pl.cdiv(rows, tm)

    # --- VMEM limit: actual working set (2x-buffered in + out, mask, slack), clamped ---
    tile_bytes = tm * W * itemsize
    vmem_needed = 4 * tile_bytes + 4 * W * itemsize + (4 << 20)
    vmem_limit = int(min(max(vmem_needed, 16 << 20), max(vmem_cap - (8 << 20), 16 << 20)))

    call_kwargs = {}
    if alias_output:
        # Reuse x's buffer for the output when the caller donates x; XLA copies otherwise.
        call_kwargs["input_output_aliases"] = {0: 0}

    head_out = pl.pallas_call(
        _scale_rows_kernel,
        out_shape=jax.ShapeDtypeStruct((rows, W), dtype),
        grid_spec=pltpu.PrefetchScalarGridSpec(
            num_scalar_prefetch=0,
            grid=(grid_rows,),
            in_specs=[
                pl.BlockSpec((tm, W), lambda i: (i, 0)),   # streamed row tiles
                pl.BlockSpec((1, W), lambda i: (0, 0)),    # mask: resident block
            ],
            out_specs=pl.BlockSpec((tm, W), lambda i: (i, 0)),
        ),
        compiler_params=pltpu.CompilerParams(
            dimension_semantics=("parallel",),
            vmem_limit_bytes=vmem_limit,
        ),
        **call_kwargs,
    )(head2d, mask_row)

    head_out = head_out.reshape(head_rows_d, D)
    if tail_rows_d:
        # Tiny non-packable remainder (< reps rows): plain broadcast multiply.
        tail_out = x_rows[head_rows_d:] * mask1d
        out_rows = jnp.concatenate([head_out, tail_out], axis=0)
    else:
        out_rows = head_out
    return out_rows.reshape(orig_shape)


if __name__ == "__main__":
    key = jax.random.PRNGKey(0)
    k1, k2, k3 = jax.random.split(key, 3)

    # Case 1: Attention.selectqkv on q/k/v: (b, heads, n, dim_head) with dim_head=64.
    #         Lane-dense repack D=64 -> W=128, no remainder.
    q = jax.random.normal(k1, (2, 3, 9, 64), dtype=jnp.float32)
    idx1 = jnp.ones((64,), jnp.float32).at[jnp.array([1, 5, 17, 40])].set(0.0)
    expected1 = q * idx1
    out1 = channel_selection(q, idx1)
    jax.block_until_ready(out1)
    assert out1.shape == q.shape
    assert jnp.allclose(out1, expected1, atol=1e-6, rtol=1e-6)

    # Case 2: FeedForward.selectdim on hidden activations: (b, n, hidden=dim*scale=72).
    #         D=72 -> W=lcm(72,128)=1152 with a small non-packable remainder (tail path).
    h = jax.random.normal(k2, (2, 10, 72), dtype=jnp.float32)
    idx2 = jnp.ones((72,), jnp.float32).at[jnp.array([0, 7, 30, 71])].set(0.0)
    expected2 = h * idx2
    out2 = channel_selection(h, idx2)
    jax.block_until_ready(out2)
    assert jnp.allclose(out2, expected2, atol=1e-6, rtol=1e-6)

    # Case 3: force a multi-step row grid (including a ragged final block).
    x3 = jax.random.normal(k3, (4, 257, 128), dtype=jnp.float32)
    idx3 = jnp.ones((128,), jnp.float32).at[jnp.array([2, 3, 63, 127])].set(0.0)
    expected3 = x3 * idx3
    out3 = channel_selection(x3, idx3, target_block_bytes=8 * 128 * 4)
    jax.block_until_ready(out3)
    assert jnp.allclose(out3, expected3, atol=1e-6, rtol=1e-6)

    print("KERNEL_OK")
</pallas_src>

<mosaic_0001>
module attributes {stable_mosaic.version = 11 : i64} {
  func.func @_scale_rows_kernel(%arg0: i32, %arg1: memref<27x128xf32, #tpu.memory_space<vmem>>, %arg2: memref<1x128xf32, #tpu.memory_space<vmem>>, %arg3: memref<27x128xf32, #tpu.memory_space<vmem>>) attributes {dimension_semantics = [#tpu.dimension_semantics<parallel>], iteration_bounds = array<i64: 1>, scalar_prefetch = 0 : i64, scratch_operands = 0 : i64, tpu.core_type = #tpu.core_type<tc>, window_params = [{transform_indices = @transform_0, window_bounds = array<i64: 27, 128>}, {pipeline_mode = #tpu.pipeline_mode<synchronous>, transform_indices = @transform_1, window_bounds = array<i64: 1, 128>}, {transform_indices = @transform_2, window_bounds = array<i64: 27, 128>}]} {
    %c0 = arith.constant 0 : index
    %c0_0 = arith.constant 0 : index
    %0 = vector.load %arg1[%c0, %c0_0] : memref<27x128xf32, #tpu.memory_space<vmem>>, vector<27x128xf32>
    %c0_1 = arith.constant 0 : index
    %c0_2 = arith.constant 0 : index
    %1 = vector.load %arg2[%c0_1, %c0_2] : memref<1x128xf32, #tpu.memory_space<vmem>>, vector<1x128xf32>
    %2 = vector.broadcast %1 : vector<1x128xf32> to vector<27x128xf32>
    %3 = arith.mulf %0, %2 : vector<27x128xf32>
    %c0_3 = arith.constant 0 : index
    %c0_4 = arith.constant 0 : index
    %4 = vector.load %arg3[%c0_3, %c0_4] : memref<27x128xf32, #tpu.memory_space<vmem>>, vector<27x128xf32>
    tpu.vector_store %arg3[%c0_3, %c0_4], %3 {strides = array<i32>} : memref<27x128xf32, #tpu.memory_space<vmem>>, vector<27x128xf32>,
    return
  }
  func.func @transform_0(%arg0: i32) -> (i32, i32) {
    %c0_i32 = arith.constant 0 : i32
    %c0_i32_0 = arith.constant 0 : i32
    return %arg0, %c0_i32 : i32, i32
  }
  func.func @transform_1(%arg0: i32) -> (i32, i32) {
    %c0_i32 = arith.constant 0 : i32
    %c0_i32_0 = arith.constant 0 : i32
    %c0_i32_1 = arith.constant 0 : i32
    return %c0_i32, %c0_i32_0 : i32, i32
  }
  func.func @transform_2(%arg0: i32) -> (i32, i32) {
    %c0_i32 = arith.constant 0 : i32
    %c0_i32_0 = arith.constant 0 : i32
    return %arg0, %c0_i32 : i32, i32
  }
}

</mosaic_0001>

<llo_original>
// kernel: tpu_custom_call.1
$region0: #{tpu_custom_call.1}
  #allocation0 [shape = 'u32[]', space=smem, size = 0x4, offset = 0x4, fixed_abs, tag = 'smem constant byte address 0x4 - core index']
  #allocation1 [shape = 'u32[144,128]{1,0:T(1,128)}', space=vmem, size = 0x12000, scoped, tag = 'internal scratch']
  %s0 = inlined_call_operand.hbm [shape: f32[27,128], index: 0, kind: input, shape index: {}, may-alias: {0,2}]
  %s1 = inlined_call_operand.vmem [shape: f32[1,128], index: 1, kind: input, shape index: {}]
  %s2 = inlined_call_operand.hbm [shape: f32[27,128], index: 2, kind: output, shape index: {}, may-alias: {0,2}]
  %s3 = sld [smem:[#allocation0]]
  $region22: #{tpu_custom_call.1} parent=0
    _
  %s5 = ssub.s32 1, %s3
  %s6 = scalar_select 0, %s5, %s3
  $region1: #{tpu_custom_call.1} parent=0
    #allocation2 [shape = 'u8[16384]{0}', space=vmem, size = 0x4000, scoped, tag = 'input window, operand 0, single buffered']
    #allocation3 [shape = 's32[1]{0}', space=sflag, size = 0x4, scoped, tag = 'scoped memory for tpu_custom_call.1']
    #allocation4 [shape = 's32[1]{0}', space=sflag, size = 0x4, scoped, tag = 'scoped memory for tpu_custom_call.1']
    #allocation5 [shape = 'u8[16384]{0}', space=vmem, size = 0x4000, scoped, tag = 'output window, operand 0, single buffered']
    %7 = vsyncpa [#allocation3], 0
    %8 = vsyncpa [#allocation4], 0
    // Predicated region
    $region2: #{tpu_custom_call.1} parent=1 // pred_check
      _
    $region3: #{tpu_custom_call.1} parent=1 // pred_check_branch
      %10 = sbr.rel (0) target = $region5
    $region4: #{tpu_custom_call.1} parent=1 // pred_region
      %s12 = ssub.s32 512, 512
      %13 = vsyncadd [#allocation3], %s12
      %s14 = sshll.u32 [#allocation2], 4
      %s15 = int_to_ptr.vmem [resolvable:$true] %s14
      %20 = dma.hbm_to_vmem [thread:$0]  %s0, 512, %s15, [#allocation3], 128, 128, 8
    $region5: #{tpu_custom_call.1} parent=1 // pred_fallthru
      _
    // Predicated region
    $region6: #{tpu_custom_call.1} parent=1 // pred_check
      _
    $region7: #{tpu_custom_call.1} parent=1 // pred_check_branch
      %22 = sbr.rel (0) target = $region9
    $region8: #{tpu_custom_call.1} parent=1 // pred_region
      _
    $region9: #{tpu_custom_call.1} parent=1 // pred_fallthru
      _
    // Predicated region
    $region10: #{tpu_custom_call.1} parent=1 // pred_check
      _
    $region11: #{tpu_custom_call.1} parent=1 // pred_check_branch
      %24 = sbr.rel (0) target = $region13
    $region12: #{tpu_custom_call.1} parent=1 // pred_region
      %25 = dma.done [#allocation3], 512
    $region13: #{tpu_custom_call.1} parent=1 // pred_fallthru
      _
    %v26 = vld [vmem:[#allocation2] sm:$0xff]
    %v27 = vld [vmem:[#allocation2 + $0x8] sm:$0xff]
    %v28 = vld [vmem:[#allocation2 + $0x10] sm:$0xff]
    %v29 = vld [vmem:[#allocation2 + $0x18] sm:$0x7]
    %v30 = vld [vmem:[%s1] sm:$0x1]
    %v32 = vlaneseq
    %v33 = vshrl.u32 %v32, 7
    %v34 = vsub.s32 0, %v33
    %v35 = vrot.slane %v30, %v34
    %v37 = vmul.f32 %v26, %v35
    %v38 = vmul.f32 %v27, %v35
    %v39 = vmul.f32 %v28, %v35
    %v40 = vmul.f32 %v29, %v35
    %41 = vst [vmem:[#allocation5] sm:$0xff] %v37
    %42 = vst [vmem:[#allocation5 + $0x8] sm:$0xff] %v38
    %43 = vst [vmem:[#allocation5 + $0x10] sm:$0xff] %v39
    %44 = vst [vmem:[#allocation5 + $0x18] sm:$0x7] %v40
    // Predicated region
    $region14: #{tpu_custom_call.1} parent=1 // pred_check
      _
    $region15: #{tpu_custom_call.1} parent=1 // pred_check_branch
      %46 = sbr.rel (0) target = $region17
    $region16: #{tpu_custom_call.1} parent=1 // pred_region
      %s48 = ssub.s32 512, 512
      %49 = vsyncadd [#allocation4], %s48
      %s50 = sshll.u32 [#allocation5], 4
      %s51 = int_to_ptr.vmem [resolvable:$true] %s50
      %56 = dma.vmem_to_hbm [thread:$0]  %s51, 512, %s2, [#allocation4], 128, 128, 8
    $region17: #{tpu_custom_call.1} parent=1 // pred_fallthru
      _
    // Predicated region
    $region18: #{tpu_custom_call.1} parent=1 // pred_check
      _
    $region19: #{tpu_custom_call.1} parent=1 // pred_check_branch
      %58 = sbr.rel (0) target = $region21
    $region20: #{tpu_custom_call.1} parent=1 // pred_region
      %59 = dma.done [#allocation4], 512
    $region21: #{tpu_custom_call.1} parent=1 // pred_fallthru
      _
    %60 = vsyncpa [#allocation3], 1
    %61 = vsyncpa [#allocation4], 1

</llo_original>
